<compile_context>
chip_gen: v6e
topology: v6e:2x2x1
jax: 0.10.0
libtpu: 0.0.40
codegen_flags: <defaults>
</compile_context>

<pallas_src>
import math
from functools import partial

import jax
import jax.numpy as jnp
from jax.experimental import pallas as pl
from jax.experimental.pallas import tpu as pltpu


def _embed_kernel(p_ref, w_ref, b_ref, o_ref):
    # One fused MXU matmul (bf16 inputs, f32 accumulation) + bias per tile.
    acc = jnp.dot(p_ref[...], w_ref[...], preferred_element_type=jnp.float32)
    o_ref[...] = (acc + b_ref[...]).astype(o_ref.dtype)


def embeding_forward(x, params, image_size, patch_size, emb_dim):
    b = x.shape[0]
    h, w = image_size
    fh, fw = patch_size
    gh, gw = h // fh, w // fw
    # output grid of the stride-2 VALID 1x1 conv on the (gh, gw) patch grid
    oh = (gh - 1) // 2 + 1
    ow = (gw - 1) // 2 + 1
    c_out = params["w_down"].shape[0]          # 120 in the module spec
    K1 = 3 * fh * fw
    M = b * oh * ow

    # --- glue: extract only the even-grid patches the downsample conv reads,
    # flattened in (c, fh, fw) order, cast to bf16 in the same producer chain.
    # With allow_input_fusion below, XLA may fuse this directly into the
    # pallas_call operand instead of writing `patches` to HBM.
    xp = x.reshape(b, 3, gh, fh, gw, fw)
    xp = xp.transpose(0, 2, 4, 1, 3, 5)        # (b, gh, gw, 3, fh, fw)
    xp = xp[:, ::2, ::2]                       # (b, oh, ow, 3, fh, fw)
    patches = xp.reshape(M, K1).astype(jnp.bfloat16)
    # TODO(synk): if input fusion does not kick in at real ViT sizes, gather the
    # even-position patches in-kernel (memory_space=pl.ANY + make_async_copy).

    # --- fuse the two convs into one matmul weight + one bias row ---
    w1 = params["w_embed"].reshape(emb_dim, K1).T             # (K1, emb_dim)
    b1 = params["b_embed"].reshape(1, emb_dim)
    w2 = params["w_down"].reshape(c_out, emb_dim).T           # (emb_dim, c_out)
    b2 = params["b_down"].reshape(1, c_out)
    w_fused = (w1 @ w2).astype(jnp.bfloat16)                  # (K1, c_out)
    b_fused = (b1 @ w2 + b2).astype(jnp.float32)              # (1, c_out), f32

    # --- tiling: pick an even tile count first (>=2 so both v7x TCs get work),
    # then TM = 8*ceil(M/(8*g)).  Pallas masks the partial last block, so no
    # row padding in HBM and no post-kernel row slice are needed.
    TM_TARGET = 1024
    g = max(2, pl.cdiv(M, TM_TARGET))
    if g % 2:
        g += 1                                 # even tile count for 2-TC balance
    TM = max(8, 8 * pl.cdiv(M, 8 * g))
    grid = (pl.cdiv(M, TM),)

    cost = pl.CostEstimate(
        flops=2 * M * K1 * c_out,
        transcendentals=0,
        bytes_accessed=M * K1 * 2 + M * c_out * 4 + K1 * c_out * 2 + c_out * 4,
    )

    out = pl.pallas_call(
        _embed_kernel,
        out_shape=jax.ShapeDtypeStruct((M, c_out), jnp.float32),
        grid=grid,
        in_specs=[
            # TODO(synk): on v7x, consider pipeline_mode=pl.Buffered(3) here once
            # the per-core grid count stays >= 2 at the deployed sizes.
            pl.BlockSpec((TM, K1), lambda i: (i, 0)),     # patches: tiled over M
            pl.BlockSpec((K1, c_out), lambda i: (0, 0)),  # fused weight: resident
            pl.BlockSpec((1, c_out), lambda i: (0, 0)),   # fused bias: resident
        ],
        out_specs=pl.BlockSpec((TM, c_out), lambda i: (i, 0)),
        compiler_params=pltpu.CompilerParams(
            dimension_semantics=("parallel",),            # megacore on v7x
            vmem_limit_bytes=32 * 1024 * 1024,            # safe on v5e/v6e/v7x
            allow_input_fusion=[True, False, False],      # fuse patch extraction
        ),
        cost_estimate=cost,
    )(patches, w_fused, b_fused)

    # (M, c_out) -> (b, oh*ow, c_out) is a free reshape (no slicing needed)
    return out.reshape(b, oh * ow, c_out)


def reference_forward(x, params, patch_size):
    """Pure-JAX f32 reference using lax convolutions (mirrors the PyTorch module)."""
    emb = jax.lax.conv_general_dilated(
        x, params["w_embed"], window_strides=patch_size, padding="VALID",
        dimension_numbers=("NCHW", "OIHW", "NCHW"))
    emb = emb + params["b_embed"].reshape(1, -1, 1, 1)
    down = jax.lax.conv_general_dilated(
        emb, params["w_down"], window_strides=(2, 2), padding="VALID",
        dimension_numbers=("NCHW", "OIHW", "NCHW"))
    down = down + params["b_down"].reshape(1, -1, 1, 1)
    down = down.transpose(0, 2, 3, 1)          # NCHW -> NHWC
    b, h, w, c = down.shape
    return down.reshape(b, h * w, c)


def init_params(key, patch_size, emb_dim, down_out=120):
    fh, fw = patch_size
    k1, k2, k3, k4 = jax.random.split(key, 4)
    # kaiming-uniform-style init (same bounds as nn.Conv2d default)
    fan_in1 = 3 * fh * fw
    bound1 = 1.0 / math.sqrt(fan_in1)
    fan_in2 = emb_dim * 1 * 1
    bound2 = 1.0 / math.sqrt(fan_in2)
    return {
        "w_embed": jax.random.uniform(k1, (emb_dim, 3, fh, fw), jnp.float32,
                                      -bound1, bound1),
        "b_embed": jax.random.uniform(k2, (emb_dim,), jnp.float32, -bound1, bound1),
        "w_down": jax.random.uniform(k3, (down_out, emb_dim, 1, 1), jnp.float32,
                                     -bound2, bound2),
        "b_down": jax.random.uniform(k4, (down_out,), jnp.float32, -bound2, bound2),
    }


if __name__ == "__main__":
    image_size = (16, 16)
    patch_size = (4, 4)
    emb_dim = 32
    batch = 2

    key = jax.random.PRNGKey(0)
    kx, kp = jax.random.split(key)
    x = jax.random.normal(kx, (batch, 3, *image_size), jnp.float32)
    params = init_params(kp, patch_size, emb_dim)

    fwd = jax.jit(partial(embeding_forward, image_size=image_size,
                          patch_size=patch_size, emb_dim=emb_dim))
    out = jax.block_until_ready(fwd(x, params))

    ref = jax.block_until_ready(reference_forward(x, params, patch_size))
    assert out.shape == ref.shape, (out.shape, ref.shape)
    # bf16 inputs with f32 accumulation -> tolerance loosened vs the f32 version
    assert jnp.allclose(out, ref, atol=2e-2, rtol=2e-2), "mismatch vs reference"

    print("KERNEL_OK")
</pallas_src>

<mosaic_0001>
module attributes {stable_mosaic.version = 11 : i64} {
  func.func @_embed_kernel(%arg0: i32, %arg1: memref<8x48xbf16, #tpu.memory_space<vmem>>, %arg2: memref<48x120xbf16, #tpu.memory_space<vmem>>, %arg3: memref<1x120xf32, #tpu.memory_space<vmem>>, %arg4: memref<8x120xf32, #tpu.memory_space<vmem>>) attributes {dimension_semantics = [#tpu.dimension_semantics<parallel>], iteration_bounds = array<i64: 1>, scalar_prefetch = 0 : i64, scratch_operands = 0 : i64, tpu.core_type = #tpu.core_type<tc>, window_params = [{transform_indices = @transform_0, window_bounds = array<i64: 8, 48>}, {pipeline_mode = #tpu.pipeline_mode<synchronous>, transform_indices = @transform_1, window_bounds = array<i64: 48, 120>}, {pipeline_mode = #tpu.pipeline_mode<synchronous>, transform_indices = @transform_2, window_bounds = array<i64: 1, 120>}, {transform_indices = @transform_3, window_bounds = array<i64: 8, 120>}]} {
    %c0 = arith.constant 0 : index
    %c0_0 = arith.constant 0 : index
    %0 = vector.load %arg1[%c0, %c0_0] : memref<8x48xbf16, #tpu.memory_space<vmem>>, vector<8x48xbf16>
    %c0_1 = arith.constant 0 : index
    %c0_2 = arith.constant 0 : index
    %1 = vector.load %arg2[%c0_1, %c0_2] : memref<48x120xbf16, #tpu.memory_space<vmem>>, vector<48x120xbf16>
    %cst = arith.constant dense<0.000000e+00> : vector<8x120xf32>
    %2 = tpu.matmul %0, %1, %cst {dimension_numbers = #tpu.dot_dimension_numbers<[1], [0], [0], [1], [0, 0, 1, 1], [], []>} : vector<8x48xbf16>, vector<48x120xbf16>, vector<8x120xf32> -> vector<8x120xf32>
    %c0_3 = arith.constant 0 : index
    %c0_4 = arith.constant 0 : index
    %3 = vector.load %arg3[%c0_3, %c0_4] : memref<1x120xf32, #tpu.memory_space<vmem>>, vector<1x120xf32>
    %4 = vector.broadcast %3 : vector<1x120xf32> to vector<8x120xf32>
    %5 = arith.addf %2, %4 : vector<8x120xf32>
    %c0_5 = arith.constant 0 : index
    %c0_6 = arith.constant 0 : index
    %6 = vector.load %arg4[%c0_5, %c0_6] : memref<8x120xf32, #tpu.memory_space<vmem>>, vector<8x120xf32>
    tpu.vector_store %arg4[%c0_5, %c0_6], %5 {strides = array<i32>} : memref<8x120xf32, #tpu.memory_space<vmem>>, vector<8x120xf32>,
    return
  }
  func.func @transform_0(%arg0: i32) -> (i32, i32) {
    %c0_i32 = arith.constant 0 : i32
    %c0_i32_0 = arith.constant 0 : i32
    return %arg0, %c0_i32 : i32, i32
  }
  func.func @transform_1(%arg0: i32) -> (i32, i32) {
    %c0_i32 = arith.constant 0 : i32
    %c0_i32_0 = arith.constant 0 : i32
    %c0_i32_1 = arith.constant 0 : i32
    return %c0_i32, %c0_i32_0 : i32, i32
  }
  func.func @transform_2(%arg0: i32) -> (i32, i32) {
    %c0_i32 = arith.constant 0 : i32
    %c0_i32_0 = arith.constant 0 : i32
    %c0_i32_1 = arith.constant 0 : i32
    return %c0_i32, %c0_i32_0 : i32, i32
  }
  func.func @transform_3(%arg0: i32) -> (i32, i32) {
    %c0_i32 = arith.constant 0 : i32
    %c0_i32_0 = arith.constant 0 : i32
    return %arg0, %c0_i32 : i32, i32
  }
}

</mosaic_0001>

<llo_original>
// kernel: embeding_forward.1
$region0: #{embeding_forward.1}
  #allocation0 [shape = 'u32[]', space=smem, size = 0x4, offset = 0x4, fixed_abs, tag = 'smem constant byte address 0x4 - core index']
  #allocation1 [shape = 'u32[144,128]{1,0:T(1,128)}', space=vmem, size = 0x12000, scoped, tag = 'internal scratch']
  %s0 = inlined_call_operand.vmem [shape: bf16[8,48], index: 0, kind: input, shape index: {}]
  %s1 = inlined_call_operand.vmem [shape: bf16[48,120], index: 1, kind: input, shape index: {}]
  %s2 = inlined_call_operand.vmem [shape: f32[1,120], index: 2, kind: input, shape index: {}]
  %s3 = inlined_call_operand.hbm [shape: f32[8,120], index: 3, kind: output, shape index: {}]
  %s4 = sld [smem:[#allocation0]]
  $region22: #{embeding_forward.1} parent=0
    _
  %s6 = ssub.s32 1, %s4
  %s7 = scalar_select 0, %s6, %s4
  $region1: #{embeding_forward.1} parent=0
    #allocation2 [shape = 'u8[4096]{0}', space=vmem, size = 0x1000, scoped, tag = 'output window, operand 0, single buffered']
    #allocation3 [shape = 's32[1]{0}', space=sflag, size = 0x4, scoped, tag = 'scoped memory for embeding_forward.1']
    %8 = vsyncpa [#allocation3], 0
    // Predicated region
    $region2: #{embeding_forward.1} parent=1 // pred_check
      _
    $region3: #{embeding_forward.1} parent=1 // pred_check_branch
      %10 = sbr.rel (0) target = $region5
    $region4: #{embeding_forward.1} parent=1 // pred_region
      _
    $region5: #{embeding_forward.1} parent=1 // pred_fallthru
      _
    // Predicated region
    $region6: #{embeding_forward.1} parent=1 // pred_check
      _
    $region7: #{embeding_forward.1} parent=1 // pred_check_branch
      %12 = sbr.rel (0) target = $region9
    $region8: #{embeding_forward.1} parent=1 // pred_region
      _
    $region9: #{embeding_forward.1} parent=1 // pred_fallthru
      _
    // Predicated region
    $region10: #{embeding_forward.1} parent=1 // pred_check
      _
    $region11: #{embeding_forward.1} parent=1 // pred_check_branch
      %14 = sbr.rel (0) target = $region13
    $region12: #{embeding_forward.1} parent=1 // pred_region
      _
    $region13: #{embeding_forward.1} parent=1 // pred_fallthru
      _
    %v16 = vld [vmem:[%s0] sm:$0xf]
    %v17 = vld [vmem:[%s1] sm:$0xf]
    %v18 = vld [vmem:[%s1 + $0x4] sm:$0xf]
    %v19 = vld [vmem:[%s1 + $0x8] sm:$0xf]
    %v20 = vld [vmem:[%s1 + $0xc] sm:$0xf]
    %v21 = vld [vmem:[%s1 + $0x10] sm:$0xf]
    %v22 = vld [vmem:[%s1 + $0x14] sm:$0xf]
    %v23 = vld [vmem:[%s2] sm:$0x1]
    %v25 = vlaneseq
    %v26 = vshrl.u32 %v25, 7
    %v27 = vsub.s32 0, %v26
    %v28 = vrot.slane %v23, %v27
    %v36 = vunpack.c.l.b16 %v17
    %v37 = vunpack.c.l.b16 %v18
    %v38 = vunpack.c.l.b16 %v19
    %v39 = vunpack.c.l.b16 %v20
    %v40 = vunpack.c.l.b16 %v21
    %v41 = vunpack.c.l.b16 %v22
    %v42 = vpack.c.b16 %v37, %v36
    %v43 = vpack.c.b16 %v39, %v38
    %v44 = vpack.c.b16 %v41, %v40
    %vm48 = vcmask 392192
    %v50 = vsel %vm48, %v16, 0
    %52 = vmatprep.subr.bf16.mxu0 0
    %53 = vmatpush1.bf16.msra.mxu0 0
    %54 = vmatprep.subr.bf16.mxu0 0
    %55 = vmatpush1.bf16.msra.mxu0 0
    %56 = vmatprep.subr.bf16.mxu0 0
    %57 = vmatpush1.bf16.msra.mxu0 0
    %58 = vmatprep.subr.bf16.mxu0 0
    %59 = vmatpush1.bf16.msra.mxu0 0
    %60 = vmatprep.subr.bf16.mxu0 0
    %61 = vmatpush1.bf16.msra.mxu0 0
    %62 = vmatprep.subr.bf16.mxu0 0
    %63 = vmatpush1.bf16.msra.mxu0 %v44
    %64 = vmatprep.subr.bf16.mxu0 0
    %65 = vmatpush1.bf16.msra.mxu0 %v43
    %66 = vmatprep.subr.bf16.mxu0 0
    %67 = vmatpush1.bf16.msra.mxu0 %v42
    %68 = vmatprep.subr.bf16.mxu0 0
    %69 = vmatpush2.bf16.msra.mxu0 0
    %70 = vmatprep.subr.bf16.mxu0 0
    %71 = vmatpush2.bf16.msra.mxu0 0
    %72 = vmatprep.subr.bf16.mxu0 0
    %73 = vmatpush2.bf16.msra.mxu0 0
    %74 = vmatprep.subr.bf16.mxu0 0
    %75 = vmatpush2.bf16.msra.mxu0 0
    %76 = vmatprep.subr.bf16.mxu0 0
    %77 = vmatpush2.bf16.msra.mxu0 0
    %78 = vmatprep.subr.bf16.mxu0 0
    %79 = vmatpush2.bf16.msra.mxu0 0
    %80 = vmatprep.subr.bf16.mxu0 0
    %81 = vmatpush2.bf16.msra.mxu0 0
    %82 = vmatprep.subr.bf16.mxu0 0
    %83 = vmatpush2.bf16.msra.mxu0 0
    %84 = vmatprep.mubr.bf16.mxu0 0
    %85 = vmatmul.mubr.bf16.gmra.mxu0 %v50
    %v86 = vpop.f32.mrf.mxu0
    %v87 = vadd.f32 %v28, %v86
    %v88 = vpop.f32.mrf.mxu0
    %v89 = vpop.f32.mrf.mxu0
    %v90 = vpop.f32.mrf.mxu0
    %91 = vdwg.mxu0
    %vm92 = vcmask 982016
    %93 = vst.msk [vmem:[#allocation2] sm:$0xff] %vm92, %v87
    // Predicated region
    $region14: #{embeding_forward.1} parent=1 // pred_check
      _
    $region15: #{embeding_forward.1} parent=1 // pred_check_branch
      %95 = sbr.rel (0) target = $region17
    $region16: #{embeding_forward.1} parent=1 // pred_region
      %s97 = ssub.s32 128, 128
      %98 = vsyncadd [#allocation3], %s97
      %s100 = sshll.u32 [#allocation2], 4
      %s101 = int_to_ptr.vmem [resolvable:$true] %s100
      %103 = dma.vmem_to_hbm [thread:$0]  %s101, 128, %s3, [#allocation3]
    $region17: #{embeding_forward.1} parent=1 // pred_fallthru
      _
    // Predicated region
    $region18: #{embeding_forward.1} parent=1 // pred_check
      _
    $region19: #{embeding_forward.1} parent=1 // pred_check_branch
      %105 = sbr.rel (0) target = $region21
    $region20: #{embeding_forward.1} parent=1 // pred_region
      %106 = dma.done [#allocation3], 128
    $region21: #{embeding_forward.1} parent=1 // pred_fallthru
      _
    %107 = vsyncpa [#allocation3], 1

</llo_original>
